<compile_context>
chip_gen: v7x
topology: tpu7x:2x2x1
jax: 0.10.0
libtpu: 0.0.40
codegen_flags: <defaults>
</compile_context>

<pallas_src>
import math

import jax
import jax.numpy as jnp
from jax.experimental import pallas as pl
from jax.experimental.pallas import tpu as pltpu


_TARGET_TILE_BYTES = 4 * 1024 * 1024      # per x tile; double-buffered in+out ~= 16 MiB
_VMEM_LIMIT_BYTES = 32 * 1024 * 1024      # safe on v5e/v6e (128 MiB phys) and v7x (64 MiB phys)
_DEFAULT_MIN_PALLAS_BYTES = 1 << 20       # below ~1 MiB the plain XLA add is as fast


def _bias_add_kernel(bias_ref, x_ref, o_ref):
    # bias_ref: (1, TF)  -- broadcast over the sublane (batch) rows
    # x_ref / o_ref: (TB, TF)
    o_ref[...] = x_ref[...] + bias_ref[...]


def _round_down(x, m):
    return (x // m) * m


def _round_up(x, m):
    return ((x + m - 1) // m) * m


def _sublane_multiple(itemsize):
    # Native second-minor tile: 8 rows (4-byte), 16 (2-byte), 32 (1-byte) dtypes.
    return max(8, 32 // max(int(itemsize), 1))


def _largest_mult128_divisor(f, max_lanes):
    """Largest multiple-of-128 divisor of f (f % 128 == 0) that is <= max_lanes."""
    m = f // 128
    d_max = max(1, min(m, max_lanes // 128))
    for d in range(d_max, 0, -1):
        if m % d == 0:
            return 128 * d
    return 128


def bias_forward(bias, x, *, min_pallas_bytes=_DEFAULT_MIN_PALLAS_BYTES):
    """Pallas TPU forward of PyTorch `Bias`: bias + x (bias broadcast over batch).

    bias: x.shape[1:], x: (B, *bias.shape).
    """
    assert bias.shape == x.shape[1:], "bias must match x's non-batch dims"
    out_dtype = jnp.promote_types(bias.dtype, x.dtype)
    B = int(x.shape[0])
    F = int(math.prod(x.shape[1:])) if x.ndim > 1 else 1
    itemsize = jnp.dtype(out_dtype).itemsize
    total_bytes = B * F * itemsize

    # Small-input fast path: launch + per-step overhead dominates below ~1 MiB.
    if total_bytes < min_pallas_bytes or B == 0 or F == 0:
        return (bias[None, ...] + x).astype(out_dtype)

    x2 = x.astype(out_dtype).reshape(B, F)
    b2 = bias.astype(out_dtype).reshape(1, F)
    rm = _sublane_multiple(itemsize)

    # Large non-128-multiple F: pad feature dim up to the next multiple of 128
    # so blocks stay lane-dense (unmasked stores) and VMEM usage stays bounded.
    F_pad = F
    if F % 128 != 0 and F * itemsize * rm > _TARGET_TILE_BYTES:
        F_pad = _round_up(F, 128)
        x2 = jnp.pad(x2, ((0, 0), (0, F_pad - F)))
        b2 = jnp.pad(b2, ((0, 0), (0, F_pad - F)))

    row_bytes = F_pad * itemsize

    if row_bytes * rm <= _TARGET_TILE_BYTES:
        # ---- Path A: full-row contiguous (TB, F) tiles, 1-D grid over batch.
        TF = F_pad
        TB = max(rm, _round_down(_TARGET_TILE_BYTES // row_bytes, rm))
        if TB >= B:
            TB = B
        n_b = pl.cdiv(B, TB)
        # Guarantee >= 2 grid blocks so both v7x TensorCores get work.
        if n_b == 1 and B >= 2 * rm:
            TB = _round_up((B + 1) // 2, rm)
            n_b = pl.cdiv(B, TB)
        grid = (n_b,)
        in_specs = [
            pl.BlockSpec((1, TF), lambda bi: (0, 0)),     # bias (VMEM-resident)
            pl.BlockSpec((TB, TF), lambda bi: (bi, 0)),   # x
        ]
        out_spec = pl.BlockSpec((TB, TF), lambda bi: (bi, 0))
        semantics = ("parallel",)
    else:
        # ---- Path B: feature-split 2-D grid; feature OUTER / batch INNER so
        # the bias block index is constant across the inner axis (stays resident).
        max_lanes = max(128, _round_down(_TARGET_TILE_BYTES // (rm * itemsize), 128))
        TF = _largest_mult128_divisor(F_pad, max_lanes)
        TB = max(rm, _round_down(_TARGET_TILE_BYTES // (TF * itemsize), rm))
        if TB >= B:
            TB = B
        grid = (F_pad // TF, pl.cdiv(B, TB))
        in_specs = [
            pl.BlockSpec((1, TF), lambda fi, bi: (0, fi)),
            pl.BlockSpec((TB, TF), lambda fi, bi: (bi, fi)),
        ]
        out_spec = pl.BlockSpec((TB, TF), lambda fi, bi: (bi, fi))
        semantics = ("parallel", "parallel")

    out2 = pl.pallas_call(
        _bias_add_kernel,
        out_shape=jax.ShapeDtypeStruct((B, F_pad), out_dtype),
        grid_spec=pltpu.PrefetchScalarGridSpec(
            num_scalar_prefetch=0,
            grid=grid,
            in_specs=in_specs,
            out_specs=out_spec,
        ),
        compiler_params=pltpu.CompilerParams(
            dimension_semantics=semantics,
            vmem_limit_bytes=_VMEM_LIMIT_BYTES,
        ),
        cost_estimate=pl.CostEstimate(
            flops=B * F_pad,
            transcendentals=0,
            bytes_accessed=(2 * B * F_pad + F_pad) * itemsize,
        ),
    )(b2, x2)

    if F_pad != F:
        out2 = out2[:, :F]
    return out2.reshape((B,) + tuple(x.shape[1:]))


if __name__ == "__main__":
    key = jax.random.PRNGKey(0)
    k = jax.random.split(key, 8)

    # 1) Primary shape from the module's intended use — force the Pallas path.
    B, C, H, W = 2, 4, 16, 16
    x = jax.random.normal(k[0], (B, C, H, W), dtype=jnp.float32)
    init_vals = jax.random.normal(k[1], (C, H, W), dtype=jnp.float32)
    out = jax.block_until_ready(bias_forward(init_vals, x, min_pallas_bytes=0))
    ref = init_vals[None, ...] + x
    assert out.shape == x.shape and out.dtype == x.dtype
    assert jnp.allclose(out, ref, atol=1e-6), "mismatch (primary shape, Pallas path)"

    # 2) Same shape via the default small-input fast path — same semantics.
    out_fast = jax.block_until_ready(bias_forward(init_vals, x))
    assert jnp.allclose(out_fast, ref, atol=1e-6), "mismatch (fast path)"

    # 3) Larger aligned f32 shape exercising the multi-block batch-tiled path.
    B3, C3, H3, W3 = 32, 16, 32, 32          # 2 MiB -> Pallas, batch split into 2 blocks
    x3 = jax.random.normal(k[2], (B3, C3, H3, W3), dtype=jnp.float32)
    b3 = jax.random.normal(k[3], (C3, H3, W3), dtype=jnp.float32)
    out3 = jax.block_until_ready(bias_forward(b3, x3))
    assert jnp.allclose(out3, b3[None, ...] + x3, atol=1e-6), "mismatch (large f32)"

    # 4) Non-128-multiple feature size (full-F block fallback) via the kernel.
    B4, C4, H4, W4 = 16, 3, 37, 53           # F = 5883, not a multiple of 128
    x4 = jax.random.normal(k[4], (B4, C4, H4, W4), dtype=jnp.float32)
    b4 = jax.random.normal(k[5], (C4, H4, W4), dtype=jnp.float32)
    out4 = jax.block_until_ready(bias_forward(b4, x4, min_pallas_bytes=0))
    assert jnp.allclose(out4, b4[None, ...] + x4, atol=1e-6), "mismatch (odd F)"

    # 5) bf16 input — dtype-aware sublane multiple (TB multiple of 16).
    B5, C5, H5, W5 = 32, 8, 32, 32
    x5 = jax.random.normal(k[6], (B5, C5, H5, W5), dtype=jnp.bfloat16)
    b5 = jax.random.normal(k[7], (C5, H5, W5), dtype=jnp.bfloat16)
    out5 = jax.block_until_ready(bias_forward(b5, x5, min_pallas_bytes=0))
    ref5 = b5[None, ...] + x5
    assert out5.dtype == jnp.bfloat16
    assert jnp.allclose(out5.astype(jnp.float32), ref5.astype(jnp.float32),
                        atol=1e-2), "mismatch (bf16)"

    print("KERNEL_OK")
</pallas_src>

<mosaic_0001>
module attributes {stable_mosaic.version = 11 : i64} {
  func.func @_bias_add_kernel(%arg0: i32, %arg1: memref<1x1024xf32, #tpu.memory_space<vmem>>, %arg2: memref<2x1024xf32, #tpu.memory_space<vmem>>, %arg3: memref<2x1024xf32, #tpu.memory_space<vmem>>) attributes {dimension_semantics = [#tpu.dimension_semantics<parallel>], iteration_bounds = array<i64: 1>, scalar_prefetch = 0 : i64, scratch_operands = 0 : i64, tpu.core_type = #tpu.core_type<tc>, window_params = [{pipeline_mode = #tpu.pipeline_mode<synchronous>, transform_indices = @transform_0, window_bounds = array<i64: 1, 1024>}, {transform_indices = @transform_1, window_bounds = array<i64: 2, 1024>}, {transform_indices = @transform_2, window_bounds = array<i64: 2, 1024>}]} {
    %c0 = arith.constant 0 : index
    %c0_0 = arith.constant 0 : index
    %0 = vector.load %arg2[%c0, %c0_0] : memref<2x1024xf32, #tpu.memory_space<vmem>>, vector<2x1024xf32>
    %c0_1 = arith.constant 0 : index
    %c0_2 = arith.constant 0 : index
    %1 = vector.load %arg1[%c0_1, %c0_2] : memref<1x1024xf32, #tpu.memory_space<vmem>>, vector<1x1024xf32>
    %2 = vector.broadcast %1 : vector<1x1024xf32> to vector<2x1024xf32>
    %3 = arith.addf %0, %2 : vector<2x1024xf32>
    %c0_3 = arith.constant 0 : index
    %c0_4 = arith.constant 0 : index
    %4 = vector.load %arg3[%c0_3, %c0_4] : memref<2x1024xf32, #tpu.memory_space<vmem>>, vector<2x1024xf32>
    tpu.vector_store %arg3[%c0_3, %c0_4], %3 {strides = array<i32>} : memref<2x1024xf32, #tpu.memory_space<vmem>>, vector<2x1024xf32>,
    return
  }
  func.func @transform_0(%arg0: i32) -> (i32, i32) {
    %c0_i32 = arith.constant 0 : i32
    %c0_i32_0 = arith.constant 0 : i32
    %c0_i32_1 = arith.constant 0 : i32
    return %c0_i32, %c0_i32_0 : i32, i32
  }
  func.func @transform_1(%arg0: i32) -> (i32, i32) {
    %c0_i32 = arith.constant 0 : i32
    %c0_i32_0 = arith.constant 0 : i32
    return %arg0, %c0_i32 : i32, i32
  }
  func.func @transform_2(%arg0: i32) -> (i32, i32) {
    %c0_i32 = arith.constant 0 : i32
    %c0_i32_0 = arith.constant 0 : i32
    return %arg0, %c0_i32 : i32, i32
  }
}

</mosaic_0001>

<llo_original>
// kernel: tpu_custom_call.1
$region0: #{tpu_custom_call.1}
  #allocation0 [shape = 'u32[]', space=smem, size = 0x4, offset = 0x4, fixed_abs, tag = 'smem constant byte address 0x4 - core index']
  #allocation1 [shape = 'u32[144,128]{1,0:T(1,128)}', space=vmem, size = 0x12000, scoped, tag = 'internal scratch']
  %s0 = inlined_call_operand.hbm [shape: f32[1,1024], index: 0, kind: input, shape index: {}]
  %s1 = inlined_call_operand.hbm [shape: f32[2,1024], index: 1, kind: input, shape index: {}]
  %s2 = inlined_call_operand.hbm [shape: f32[2,1024], index: 2, kind: output, shape index: {}]
  %s3 = sld [smem:[#allocation0]]
  $region26: #{tpu_custom_call.1} parent=0
    _
  %s5 = ssub.s32 1, %s3
  %s6 = scalar_select 0, %s5, %s3
  $region1: #{tpu_custom_call.1} parent=0
    #allocation2 [shape = 'u8[4096]{0}', space=vmem, size = 0x1000, scoped, tag = 'input window, operand 0, single buffered']
    #allocation3 [shape = 's32[1]{0}', space=sflag, size = 0x4, scoped, tag = 'scoped memory for tpu_custom_call.1']
    #allocation4 [shape = 's32[1]{0}', space=sflag, size = 0x4, scoped, tag = 'scoped memory for tpu_custom_call.1']
    #allocation5 [shape = 'u8[8192]{0}', space=vmem, size = 0x2000, scoped, tag = 'input window, operand 1, single buffered']
    #allocation6 [shape = 's32[1]{0}', space=sflag, size = 0x4, scoped, tag = 'scoped memory for tpu_custom_call.1']
    #allocation7 [shape = 'u8[8192]{0}', space=vmem, size = 0x2000, scoped, tag = 'output window, operand 0, single buffered']
    %7 = vsyncpa [#allocation3], 0
    %8 = vsyncpa [#allocation6], 0
    %9 = vsyncpa [#allocation4], 0
    // Predicated region
    $region2: #{tpu_custom_call.1} parent=1 // pred_check
      _
    $region3: #{tpu_custom_call.1} parent=1 // pred_check_branch
      %11 = sbr.rel (0) target = $region5
    $region4: #{tpu_custom_call.1} parent=1 // pred_region
      %s13 = ssub.s32 128, 128
      %14 = vsyncadd [#allocation3], %s13
      %s16 = sshll.u32 [#allocation2], 4
      %s17 = int_to_ptr.vmem [resolvable:$true] %s16
      %19 = dma.hbm_to_vmem [thread:$0]  %s0, 128, %s17, [#allocation3]
    $region5: #{tpu_custom_call.1} parent=1 // pred_fallthru
      _
    // Predicated region
    $region6: #{tpu_custom_call.1} parent=1 // pred_check
      _
    $region7: #{tpu_custom_call.1} parent=1 // pred_check_branch
      %21 = sbr.rel (0) target = $region9
    $region8: #{tpu_custom_call.1} parent=1 // pred_region
      %s23 = ssub.s32 256, 256
      %24 = vsyncadd [#allocation6], %s23
      %s26 = sshll.u32 [#allocation5], 4
      %s27 = int_to_ptr.vmem [resolvable:$true] %s26
      %29 = dma.hbm_to_vmem [thread:$0]  %s1, 256, %s27, [#allocation6]
    $region9: #{tpu_custom_call.1} parent=1 // pred_fallthru
      _
    // Predicated region
    $region10: #{tpu_custom_call.1} parent=1 // pred_check
      _
    $region11: #{tpu_custom_call.1} parent=1 // pred_check_branch
      %31 = sbr.rel (0) target = $region13
    $region12: #{tpu_custom_call.1} parent=1 // pred_region
      %32 = dma.done [#allocation3], 128
    $region13: #{tpu_custom_call.1} parent=1 // pred_fallthru
      _
    // Predicated region
    $region14: #{tpu_custom_call.1} parent=1 // pred_check
      _
    $region15: #{tpu_custom_call.1} parent=1 // pred_check_branch
      %34 = sbr.rel (0) target = $region17
    $region16: #{tpu_custom_call.1} parent=1 // pred_region
      %35 = dma.done [#allocation6], 256
    $region17: #{tpu_custom_call.1} parent=1 // pred_fallthru
      _
    %v36 = vld [vmem:[#allocation5] sm:$0xff]
    %v37 = vld [vmem:[#allocation5 + $0x8] sm:$0xff]
    %v38 = vld [vmem:[#allocation2] sm:$0xff]
    %v40 = vlaneseq
    %v41 = vshrl.u32 %v40, 7
    %v42 = vsub.s32 0, %v41
    %v43 = vrot.slane %v38, %v42
    %v44 = vlaneseq
    %v45 = vshrl.u32 %v44, 7
    %v46 = vsub.s32 1, %v45
    %v47 = vrot.slane %v38, %v46
    %v48 = vlaneseq
    %v49 = vshrl.u32 %v48, 7
    %v50 = vsub.s32 2, %v49
    %v51 = vrot.slane %v38, %v50
    %v52 = vlaneseq
    %v53 = vshrl.u32 %v52, 7
    %v54 = vsub.s32 3, %v53
    %v55 = vrot.slane %v38, %v54
    %v56 = vlaneseq
    %v57 = vshrl.u32 %v56, 7
    %v58 = vsub.s32 4, %v57
    %v59 = vrot.slane %v38, %v58
    %v60 = vlaneseq
    %v61 = vshrl.u32 %v60, 7
    %v62 = vsub.s32 5, %v61
    %v63 = vrot.slane %v38, %v62
    %v64 = vlaneseq
    %v65 = vshrl.u32 %v64, 7
    %v66 = vsub.s32 6, %v65
    %v67 = vrot.slane %v38, %v66
    %v68 = vlaneseq
    %v69 = vshrl.u32 %v68, 7
    %v70 = vsub.s32 7, %v69
    %v71 = vrot.slane %v38, %v70
    %v72 = vcombine.low %v43, %v47
    %v73 = vcombine.low %v51, %v55
    %v75 = vunpack.c.l.s4 1983009808
    %v76 = vunpack.c.0.s8 %v75
    %v77 = vlaneseq
    %v78 = vshrl.u32 %v77, 7
    %v79 = vsub.s32 %v76, %v78
    %v80 = vrot.slane %v72, %v79
    %v82 = vunpack.c.l.s4 1983009808
    %v83 = vunpack.c.0.s8 %v82
    %v84 = vlaneseq
    %v85 = vshrl.u32 %v84, 7
    %v86 = vsub.s32 %v83, %v85
    %v87 = vrot.slane %v73, %v86
    %v88 = vcombine.low %v80, %v87
    %v89 = vcombine.low %v59, %v63
    %v90 = vcombine.low %v67, %v71
    %v92 = vunpack.c.l.s4 1983009808
    %v93 = vunpack.c.0.s8 %v92
    %v94 = vlaneseq
    %v95 = vshrl.u32 %v94, 7
    %v96 = vsub.s32 %v93, %v95
    %v97 = vrot.slane %v89, %v96
    %v99 = vunpack.c.l.s4 1983009808
    %v100 = vunpack.c.0.s8 %v99
    %v101 = vlaneseq
    %v102 = vshrl.u32 %v101, 7
    %v103 = vsub.s32 %v100, %v102
    %v104 = vrot.slane %v90, %v103
    %v105 = vcombine.low %v97, %v104
    %v108 = vadd.f32 %v36, %v88
    %v109 = vadd.f32 %v37, %v105
    %110 = vst [vmem:[#allocation7] sm:$0xff] %v108
    %111 = vst [vmem:[#allocation7 + $0x8] sm:$0xff] %v109
    // Predicated region
    $region18: #{tpu_custom_call.1} parent=1 // pred_check
      _
    $region19: #{tpu_custom_call.1} parent=1 // pred_check_branch
      %113 = sbr.rel (0) target = $region21
    $region20: #{tpu_custom_call.1} parent=1 // pred_region
      %s115 = ssub.s32 256, 256
      %116 = vsyncadd [#allocation4], %s115
      %s118 = sshll.u32 [#allocation7], 4
      %s119 = int_to_ptr.vmem [resolvable:$true] %s118
      %121 = dma.vmem_to_hbm [thread:$0]  %s119, 256, %s2, [#allocation4]
    $region21: #{tpu_custom_call.1} parent=1 // pred_fallthru
      _
    // Predicated region
    $region22: #{tpu_custom_call.1} parent=1 // pred_check
      _
    $region23: #{tpu_custom_call.1} parent=1 // pred_check_branch
      %123 = sbr.rel (0) target = $region25
    $region24: #{tpu_custom_call.1} parent=1 // pred_region
      %124 = dma.done [#allocation4], 256
    $region25: #{tpu_custom_call.1} parent=1 // pred_fallthru
      _
    %125 = vsyncpa [#allocation3], 1
    %126 = vsyncpa [#allocation6], 1
    %127 = vsyncpa [#allocation4], 1

</llo_original>
